<compile_context>
chip_gen: v5e
topology: v5e:2x2
jax: 0.10.0
libtpu: 0.0.40
codegen_flags: <defaults>
</compile_context>

<pallas_src>
import functools

import jax
import jax.numpy as jnp
from jax.experimental import pallas as pl
from jax.experimental.pallas import tpu as pltpu


def _round_up(x: int, m: int) -> int:
    return (x + m - 1) // m * m


_VMEM_CAP_CACHE = None


def _vmem_capacity_bytes() -> int:
    """Physical VMEM capacity (per TensorCore), with a conservative fallback."""
    global _VMEM_CAP_CACHE
    if _VMEM_CAP_CACHE is None:
        try:
            _VMEM_CAP_CACHE = int(pltpu.get_tpu_info().vmem_capacity_bytes)
        except Exception:
            _VMEM_CAP_CACHE = 64 * 1024 * 1024  # v7x per-TC VMEM (smallest)
    return _VMEM_CAP_CACHE


def _pick_feature_tile(N: int, tn_req: int) -> int:
    """Largest tile <= tn_req that is a multiple of 128 and divides N exactly
    (so W_enc is never padded). Falls back to a padded tile only when N itself
    is not a multiple of 128 (rare for SAEs)."""
    tn_cap = min(tn_req, _round_up(N, 128))
    if N % 128 != 0:
        return tn_cap
    tn = max(128, (tn_cap // 128) * 128)
    while tn > 128 and N % tn != 0:
        tn -= 128
    return tn


def _select_tiles(M, K, N, cbytes, obytes, tm_req, tn_req, vmem_budget):
    """Clamp/align the requested tiles and shrink them until the double-
    buffered VMEM footprint fits the budget (handles v7x's smaller VMEM)."""
    tm = min(tm_req, _round_up(M, 8))
    tn = _pick_feature_tile(N, tn_req)

    def footprint(tm_, tn_):
        x_blk = tm_ * K * cbytes
        w_blk = K * tn_ * cbytes
        o_blk = tm_ * tn_ * obytes
        b_blk = tn_ * 4
        return 2 * (x_blk + w_blk + o_blk + b_blk)  # double-buffered

    while footprint(tm, tn) > vmem_budget and tn > 128:
        tn = _pick_feature_tile(N, max(128, tn // 2))
    while footprint(tm, tn) > vmem_budget and tm > 8:
        tm = max(8, _round_up(tm // 2, 8))
    return tm, tn


def _sae_encode_kernel(x_ref, w_ref, b_ref, o_ref):
    """One (tm, tn) output tile: full-K matmul + bias + ReLU, fused."""
    acc = jnp.dot(x_ref[...], w_ref[...], preferred_element_type=jnp.float32)
    o_ref[...] = jnp.maximum(acc + b_ref[...], 0.0).astype(o_ref.dtype)


def prepare_autoencoder_params(w_enc, b_enc, compute_dtype=jnp.bfloat16):
    """One-time parameter prep (do this ONCE, not per batch):
    cast W_enc to the MXU compute dtype and lay out b_enc as an f32 row."""
    w_c = w_enc.astype(compute_dtype)
    b_row = b_enc.astype(jnp.float32).reshape(1, -1)
    return w_c, b_row


@functools.partial(jax.jit, static_argnames=("tm", "tn", "out_dtype"))
def autoencoder_latents_forward(
    x,
    w_enc,
    b_dec,
    b_enc_row,
    *,
    tm: int = 256,
    tn: int = 2048,
    out_dtype=jnp.bfloat16,
):
    """Pallas implementation of AutoencoderLatents.forward (SAE encode).

    x:          [M, K]   tokens, d_model
    w_enc:      [K, N]   pre-cast to the desired compute dtype (see
                         prepare_autoencoder_params) — its dtype feeds the MXU.
    b_dec:      [K]      decoder bias (folded into x here; cheap, fuses w/ cast)
    b_enc_row:  [1, N]   encoder bias (f32)
    returns     [M, N]   latent activations (post-ReLU), dtype `out_dtype`.

    tm/tn are upper bounds; they are aligned to (8, 128), made to divide N,
    and shrunk to fit the device's VMEM (v7x gets smaller feature tiles).
    """
    M, K = x.shape
    K2, N = w_enc.shape
    assert K == K2, "w_enc must be [d_model, n_features]"
    assert b_enc_row.shape == (1, N), "b_enc_row must be [1, n_features]"

    compute_dtype = w_enc.dtype
    cbytes = jnp.dtype(compute_dtype).itemsize
    obytes = jnp.dtype(out_dtype).itemsize

    vmem_cap = _vmem_capacity_bytes()
    tm, tn = _select_tiles(M, K, N, cbytes, obytes, tm, tn, vmem_budget=vmem_cap // 2)

    Mp = _round_up(M, tm)
    Np = _round_up(N, tn)

    # Fold the decoder bias into x (exact in the f32 path; quantized with x in
    # the bf16 path — well within SAE tolerance). Fuses with the cast.
    x_c = (x - b_dec).astype(compute_dtype)
    w_c = w_enc
    b_row = b_enc_row.astype(jnp.float32)

    if Mp != M:  # token padding is tiny (M*K) and sliced off afterwards
        x_c = jnp.pad(x_c, ((0, Mp - M), (0, 0)))
    if Np != N:  # only hit when n_features is not a multiple of 128
        w_c = jnp.pad(w_c, ((0, 0), (0, Np - N)))
        b_row = jnp.pad(b_row, ((0, 0), (0, Np - N)))

    # Grid ordered (j, i): j = feature tile (outer), i = token tile (inner).
    # W_enc's index_map depends only on j -> each (K, tn) weight block is
    # streamed from HBM exactly once and stays VMEM-resident over all tokens.
    grid = (Np // tn, Mp // tm)

    cost = pl.CostEstimate(
        flops=2 * M * K * N,
        transcendentals=0,
        bytes_accessed=M * K * cbytes + K * N * cbytes + M * N * obytes + N * 4,
    )

    out = pl.pallas_call(
        _sae_encode_kernel,
        out_shape=jax.ShapeDtypeStruct((Mp, Np), out_dtype),
        grid_spec=pltpu.PrefetchScalarGridSpec(
            num_scalar_prefetch=0,
            grid=grid,
            in_specs=[
                pl.BlockSpec((tm, K), lambda j, i: (i, 0)),  # x   (full K)
                pl.BlockSpec((K, tn), lambda j, i: (0, j)),  # W_enc (j-resident)
                pl.BlockSpec((1, tn), lambda j, i: (0, j)),  # b_enc
            ],
            out_specs=pl.BlockSpec((tm, tn), lambda j, i: (i, j)),
        ),
        compiler_params=pltpu.CompilerParams(
            dimension_semantics=("parallel", "parallel"),
            vmem_limit_bytes=min(int(vmem_cap * 3 // 4), 96 * 1024 * 1024),
        ),
        cost_estimate=cost,
    )(x_c, w_c, b_row)

    # Strip any padding.
    return out[:M, :N]


if __name__ == "__main__":
    # Small shapes consistent with the module's semantics:
    # batch=2, seq=13 -> 26 tokens (deliberately not a multiple of 8 to
    # exercise the padding path), d_model=128, n_features=256
    # (n_features is 32768 in the real module; scaled down here).
    batch, seq, d_model, n_features = 2, 13, 128, 256
    M = batch * seq

    key = jax.random.PRNGKey(0)
    kx, kw, kbd, kbe = jax.random.split(key, 4)

    x = jax.random.normal(kx, (batch, seq, d_model), dtype=jnp.float32)
    w_enc = jax.random.normal(kw, (d_model, n_features), dtype=jnp.float32) * 0.02
    b_dec = jax.random.normal(kbd, (d_model,), dtype=jnp.float32) * 0.01
    b_enc = jax.random.normal(kbe, (n_features,), dtype=jnp.float32) * 0.01

    x_flat = x.reshape(M, d_model)  # glue: flatten (batch, seq) -> tokens

    # Pure-JAX reference.
    ref = jnp.maximum((x_flat - b_dec) @ w_enc + b_enc, 0.0)

    # 1) f32 compute + f32 output path: must match the reference tightly.
    w_f32, b_row_f32 = prepare_autoencoder_params(
        w_enc, b_enc, compute_dtype=jnp.float32
    )
    latents_f32 = autoencoder_latents_forward(
        x_flat, w_f32, b_dec, b_row_f32, out_dtype=jnp.float32
    )
    jax.block_until_ready(latents_f32)
    assert latents_f32.shape == (M, n_features)
    assert jnp.allclose(latents_f32, ref, atol=1e-4, rtol=1e-4)

    # 2) Default fast path: weights pre-cast to bf16 ONCE, bf16 output,
    #    f32 MXU accumulation. Looser tolerance.
    w_bf16, b_row = prepare_autoencoder_params(w_enc, b_enc)  # do once, reuse
    latents = autoencoder_latents_forward(x_flat, w_bf16, b_dec, b_row)
    latents = latents.reshape(batch, seq, n_features)
    jax.block_until_ready(latents)
    assert latents.shape == (batch, seq, n_features)
    assert latents.dtype == jnp.bfloat16
    assert jnp.allclose(
        latents.astype(jnp.float32),
        ref.reshape(batch, seq, n_features),
        atol=3e-2,
        rtol=3e-2,
    )

    print("KERNEL_OK")
</pallas_src>

<mosaic_0001>
module attributes {stable_mosaic.version = 11 : i64} {
  func.func @_sae_encode_kernel(%arg0: i32, %arg1: i32, %arg2: memref<32x128xf32, #tpu.memory_space<vmem>>, %arg3: memref<128x256xf32, #tpu.memory_space<vmem>>, %arg4: memref<1x256xf32, #tpu.memory_space<vmem>>, %arg5: memref<32x256xf32, #tpu.memory_space<vmem>>) attributes {dimension_semantics = [#tpu.dimension_semantics<parallel>, #tpu.dimension_semantics<parallel>], iteration_bounds = array<i64: 1, 1>, scalar_prefetch = 0 : i64, scratch_operands = 0 : i64, tpu.core_type = #tpu.core_type<tc>, window_params = [{transform_indices = @transform_0, window_bounds = array<i64: 32, 128>}, {transform_indices = @transform_1, window_bounds = array<i64: 128, 256>}, {transform_indices = @transform_2, window_bounds = array<i64: 1, 256>}, {transform_indices = @transform_3, window_bounds = array<i64: 32, 256>}]} {
    %c0 = arith.constant 0 : index
    %c0_0 = arith.constant 0 : index
    %0 = vector.load %arg2[%c0, %c0_0] : memref<32x128xf32, #tpu.memory_space<vmem>>, vector<32x128xf32>
    %c0_1 = arith.constant 0 : index
    %c0_2 = arith.constant 0 : index
    %1 = vector.load %arg3[%c0_1, %c0_2] : memref<128x256xf32, #tpu.memory_space<vmem>>, vector<128x256xf32>
    %cst = arith.constant dense<0.000000e+00> : vector<32x256xf32>
    %2 = tpu.matmul %0, %1, %cst {dimension_numbers = #tpu.dot_dimension_numbers<[1], [0], [0], [1], [0, 0, 1, 1], [], []>} : vector<32x128xf32>, vector<128x256xf32>, vector<32x256xf32> -> vector<32x256xf32>
    %c0_3 = arith.constant 0 : index
    %c0_4 = arith.constant 0 : index
    %3 = vector.load %arg4[%c0_3, %c0_4] : memref<1x256xf32, #tpu.memory_space<vmem>>, vector<1x256xf32>
    %4 = vector.broadcast %3 : vector<1x256xf32> to vector<32x256xf32>
    %5 = arith.addf %2, %4 : vector<32x256xf32>
    %cst_5 = arith.constant 0.000000e+00 : f32
    %6 = vector.broadcast %cst_5 : f32 to vector<32x256xf32>
    %7 = arith.maximumf %5, %6 : vector<32x256xf32>
    %c0_6 = arith.constant 0 : index
    %c0_7 = arith.constant 0 : index
    %8 = vector.load %arg5[%c0_6, %c0_7] : memref<32x256xf32, #tpu.memory_space<vmem>>, vector<32x256xf32>
    tpu.vector_store %arg5[%c0_6, %c0_7], %7 {strides = array<i32>} : memref<32x256xf32, #tpu.memory_space<vmem>>, vector<32x256xf32>,
    return
  }
  func.func @transform_0(%arg0: i32, %arg1: i32) -> (i32, i32) {
    %c0_i32 = arith.constant 0 : i32
    %c0_i32_0 = arith.constant 0 : i32
    return %arg1, %c0_i32 : i32, i32
  }
  func.func @transform_1(%arg0: i32, %arg1: i32) -> (i32, i32) {
    %c0_i32 = arith.constant 0 : i32
    %c0_i32_0 = arith.constant 0 : i32
    return %c0_i32, %arg0 : i32, i32
  }
  func.func @transform_2(%arg0: i32, %arg1: i32) -> (i32, i32) {
    %c0_i32 = arith.constant 0 : i32
    %c0_i32_0 = arith.constant 0 : i32
    return %c0_i32, %arg0 : i32, i32
  }
  func.func @transform_3(%arg0: i32, %arg1: i32) -> (i32, i32) {
    %c0_i32 = arith.constant 0 : i32
    return %arg1, %arg0 : i32, i32
  }
}

</mosaic_0001>

<llo_original>
// kernel: autoencoder_latents_forward.1
$region0: #{autoencoder_latents_forward.1}
  #allocation0 [shape = 'u32[]', space=smem, size = 0x4, offset = 0x4, fixed_abs, tag = 'smem constant byte address 0x4 - core index']
  #allocation1 [shape = 'u32[72,128]{1,0:T(1,128)}', space=vmem, size = 0x9000, scoped, tag = 'internal scratch']
  %s0 = inlined_call_operand.vmem [shape: f32[32,128], index: 0, kind: input, shape index: {}]
  %s1 = inlined_call_operand.hbm [shape: f32[128,256], index: 1, kind: input, shape index: {}]
  %s2 = inlined_call_operand.vmem [shape: f32[1,256], index: 2, kind: input, shape index: {}]
  %s3 = inlined_call_operand.hbm [shape: f32[32,256], index: 3, kind: output, shape index: {}]
  %s4 = sld [smem:[#allocation0]]
  $region26: #{autoencoder_latents_forward.1} parent=0
    _
  %s6 = ssub.s32 1, %s4
  %s7 = scalar_select 0, %s6, %s4
  $region1: #{autoencoder_latents_forward.1} parent=0
    #allocation2 [shape = 'u8[131072]{0}', space=vmem, size = 0x20000, scoped, tag = 'input window, operand 1, single buffered']
    #allocation3 [shape = 's32[1]{0}', space=sflag, size = 0x4, scoped, tag = 'scoped memory for autoencoder_latents_forward.1']
    #allocation4 [shape = 's32[1]{0}', space=sflag, size = 0x4, scoped, tag = 'scoped memory for autoencoder_latents_forward.1']
    #allocation5 [shape = 'u8[32768]{0}', space=vmem, size = 0x8000, scoped, tag = 'output window, operand 0, single buffered']
    %8 = vsyncpa [#allocation3], 0
    %9 = vsyncpa [#allocation4], 0
    // Predicated region
    $region2: #{autoencoder_latents_forward.1} parent=1 // pred_check
      _
    $region3: #{autoencoder_latents_forward.1} parent=1 // pred_check_branch
      %11 = sbr.rel (0) target = $region5
    $region4: #{autoencoder_latents_forward.1} parent=1 // pred_region
      _
    $region5: #{autoencoder_latents_forward.1} parent=1 // pred_fallthru
      _
    // Predicated region
    $region6: #{autoencoder_latents_forward.1} parent=1 // pred_check
      _
    $region7: #{autoencoder_latents_forward.1} parent=1 // pred_check_branch
      %13 = sbr.rel (0) target = $region9
    $region8: #{autoencoder_latents_forward.1} parent=1 // pred_region
      %15 = vsyncadd [#allocation3], 0
      %s16 = sshll.u32 %s1, 4
      %s17 = int_to_ptr.hbm [resolvable:$true] %s16
      %s18 = sshll.u32 [#allocation2], 4
      %s19 = int_to_ptr.vmem [resolvable:$true] %s18
      %24 = dma.hbm_to_vmem [thread:$0]  %s17, 4096, %s19, [#allocation3], 256, 256, 16
    $region9: #{autoencoder_latents_forward.1} parent=1 // pred_fallthru
      _
    // Predicated region
    $region10: #{autoencoder_latents_forward.1} parent=1 // pred_check
      _
    $region11: #{autoencoder_latents_forward.1} parent=1 // pred_check_branch
      %26 = sbr.rel (0) target = $region13
    $region12: #{autoencoder_latents_forward.1} parent=1 // pred_region
      _
    $region13: #{autoencoder_latents_forward.1} parent=1 // pred_fallthru
      _
    // Predicated region
    $region14: #{autoencoder_latents_forward.1} parent=1 // pred_check
      _
    $region15: #{autoencoder_latents_forward.1} parent=1 // pred_check_branch
      %28 = sbr.rel (0) target = $region17
    $region16: #{autoencoder_latents_forward.1} parent=1 // pred_region
      %30 = dma.done [#allocation3], 4096
    $region17: #{autoencoder_latents_forward.1} parent=1 // pred_fallthru
      _
    %v31 = vld [vmem:[%s0] sm:$0xff]
    %v32 = vld [vmem:[%s0 + $0x8] sm:$0xff]
    %v33 = vld [vmem:[%s0 + $0x10] sm:$0xff]
    %v34 = vld [vmem:[%s0 + $0x18] sm:$0xff]
    %v35 = vld [vmem:[#allocation2] sm:$0xff]
    %v36 = vld [vmem:[#allocation2 + $0x8] sm:$0xff]
    %v37 = vld [vmem:[#allocation2 + $0x10] sm:$0xff]
    %v38 = vld [vmem:[#allocation2 + $0x18] sm:$0xff]
    %v39 = vld [vmem:[#allocation2 + $0x20] sm:$0xff]
    %v40 = vld [vmem:[#allocation2 + $0x28] sm:$0xff]
    %v41 = vld [vmem:[#allocation2 + $0x30] sm:$0xff]
    %v42 = vld [vmem:[#allocation2 + $0x38] sm:$0xff]
    %v43 = vld [vmem:[#allocation2 + $0x40] sm:$0xff]
    %v44 = vld [vmem:[#allocation2 + $0x48] sm:$0xff]
    %v45 = vld [vmem:[#allocation2 + $0x50] sm:$0xff]
    %v46 = vld [vmem:[#allocation2 + $0x58] sm:$0xff]
    %v47 = vld [vmem:[#allocation2 + $0x60] sm:$0xff]
    %v48 = vld [vmem:[#allocation2 + $0x68] sm:$0xff]
    %v49 = vld [vmem:[#allocation2 + $0x70] sm:$0xff]
    %v50 = vld [vmem:[#allocation2 + $0x78] sm:$0xff]
    %v51 = vld [vmem:[#allocation2 + $0x80] sm:$0xff]
    %v52 = vld [vmem:[#allocation2 + $0x88] sm:$0xff]
    %v53 = vld [vmem:[#allocation2 + $0x90] sm:$0xff]
    %v54 = vld [vmem:[#allocation2 + $0x98] sm:$0xff]
    %v55 = vld [vmem:[#allocation2 + $0xa0] sm:$0xff]
    %v56 = vld [vmem:[#allocation2 + $0xa8] sm:$0xff]
    %v57 = vld [vmem:[#allocation2 + $0xb0] sm:$0xff]
    %v58 = vld [vmem:[#allocation2 + $0xb8] sm:$0xff]
    %v59 = vld [vmem:[#allocation2 + $0xc0] sm:$0xff]
    %v60 = vld [vmem:[#allocation2 + $0xc8] sm:$0xff]
    %v61 = vld [vmem:[#allocation2 + $0xd0] sm:$0xff]
    %v62 = vld [vmem:[#allocation2 + $0xd8] sm:$0xff]
    %v63 = vld [vmem:[#allocation2 + $0xe0] sm:$0xff]
    %v64 = vld [vmem:[#allocation2 + $0xe8] sm:$0xff]
    %v65 = vld [vmem:[#allocation2 + $0xf0] sm:$0xff]
    %v66 = vld [vmem:[#allocation2 + $0xf8] sm:$0xff]
    %v67 = vld [vmem:[%s2] sm:$0x3]
    %v69 = vperm.slane %v67, 0
    %v70 = vperm.slane %v67, 1
    %73 = vmatpush.msra.mxu0 %v65
    %74 = vmatpush.msra.mxu0 %v63
    %75 = vmatpush.msra.mxu0 %v61
    %76 = vmatpush.msra.mxu0 %v59
    %77 = vmatpush.msra.mxu0 %v57
    %78 = vmatpush.msra.mxu0 %v55
    %79 = vmatpush.msra.mxu0 %v53
    %80 = vmatpush.msra.mxu0 %v51
    %81 = vmatpush.msra.mxu0 %v49
    %82 = vmatpush.msra.mxu0 %v47
    %83 = vmatpush.msra.mxu0 %v45
    %84 = vmatpush.msra.mxu0 %v43
    %85 = vmatpush.msra.mxu0 %v41
    %86 = vmatpush.msra.mxu0 %v39
    %87 = vmatpush.msra.mxu0 %v37
    %88 = vmatpush.msra.mxu0 %v35
    %89 = vmatmul.f32.gmra.mxu0 %v31
    %v90 = vpop.f32.mrf.mxu0
    %v91 = vadd.f32 %v69, %v90
    %92 = vmatmul.f32.gmra.mxu0 %v32
    %v93 = vpop.f32.mrf.mxu0
    %v94 = vadd.f32 %v69, %v93
    %95 = vmatmul.f32.gmra.mxu0 %v33
    %v96 = vpop.f32.mrf.mxu0
    %v97 = vadd.f32 %v69, %v96
    %98 = vmatmul.f32.gmra.mxu0 %v34
    %v99 = vpop.f32.mrf.mxu0
    %v100 = vadd.f32 %v69, %v99
    %101 = vdwg.mxu0
    %102 = vmatpush.msra.mxu0 %v66
    %103 = vmatpush.msra.mxu0 %v64
    %104 = vmatpush.msra.mxu0 %v62
    %105 = vmatpush.msra.mxu0 %v60
    %106 = vmatpush.msra.mxu0 %v58
    %107 = vmatpush.msra.mxu0 %v56
    %108 = vmatpush.msra.mxu0 %v54
    %109 = vmatpush.msra.mxu0 %v52
    %110 = vmatpush.msra.mxu0 %v50
    %111 = vmatpush.msra.mxu0 %v48
    %112 = vmatpush.msra.mxu0 %v46
    %113 = vmatpush.msra.mxu0 %v44
    %114 = vmatpush.msra.mxu0 %v42
    %115 = vmatpush.msra.mxu0 %v40
    %116 = vmatpush.msra.mxu0 %v38
    %117 = vmatpush.msra.mxu0 %v36
    %118 = vmatmul.f32.gmra.mxu0 %v31
    %v119 = vpop.f32.mrf.mxu0
    %v120 = vadd.f32 %v70, %v119
    %121 = vmatmul.f32.gmra.mxu0 %v32
    %v122 = vpop.f32.mrf.mxu0
    %v123 = vadd.f32 %v70, %v122
    %124 = vmatmul.f32.gmra.mxu0 %v33
    %v125 = vpop.f32.mrf.mxu0
    %v126 = vadd.f32 %v70, %v125
    %127 = vmatmul.f32.gmra.mxu0 %v34
    %v128 = vpop.f32.mrf.mxu0
    %v129 = vadd.f32 %v70, %v128
    %130 = vdwg.mxu0
    %v131 = vmax.f32 %v91, 0.0
    %v132 = vmax.f32 %v120, 0.0
    %v133 = vmax.f32 %v94, 0.0
    %v134 = vmax.f32 %v123, 0.0
    %v135 = vmax.f32 %v97, 0.0
    %v136 = vmax.f32 %v126, 0.0
    %v137 = vmax.f32 %v100, 0.0
    %v138 = vmax.f32 %v129, 0.0
    %139 = vst [vmem:[#allocation5] sm:$0xff] %v131
    %140 = vst [vmem:[#allocation5 + $0x8] sm:$0xff] %v132
    %141 = vst [vmem:[#allocation5 + $0x10] sm:$0xff] %v133
    %142 = vst [vmem:[#allocation5 + $0x18] sm:$0xff] %v134
    %143 = vst [vmem:[#allocation5 + $0x20] sm:$0xff] %v135
    %144 = vst [vmem:[#allocation5 + $0x28] sm:$0xff] %v136
    %145 = vst [vmem:[#allocation5 + $0x30] sm:$0xff] %v137
    %146 = vst [vmem:[#allocation5 + $0x38] sm:$0xff] %v138
    // Predicated region
    $region18: #{autoencoder_latents_forward.1} parent=1 // pred_check
      _
    $region19: #{autoencoder_latents_forward.1} parent=1 // pred_check_branch
      %148 = sbr.rel (0) target = $region21
    $region20: #{autoencoder_latents_forward.1} parent=1 // pred_region
      %150 = vsyncadd [#allocation4], 0
      %s151 = sshll.u32 [#allocation5], 4
      %s152 = int_to_ptr.vmem [resolvable:$true] %s151
      %s153 = sshll.u32 %s3, 4
      %s154 = int_to_ptr.hbm [resolvable:$true] %s153
      %159 = dma.vmem_to_hbm [thread:$0]  %s152, 1024, %s154, [#allocation4], 256, 256, 16
    $region21: #{autoencoder_latents_forward.1} parent=1 // pred_fallthru
      _
    // Predicated region
    $region22: #{autoencoder_latents_forward.1} parent=1 // pred_check
      _
    $region23: #{autoencoder_latents_forward.1} parent=1 // pred_check_branch
      %161 = sbr.rel (0) target = $region25
    $region24: #{autoencoder_latents_forward.1} parent=1 // pred_region
      %163 = dma.done [#allocation4], 1024
    $region25: #{autoencoder_latents_forward.1} parent=1 // pred_fallthru
      _
    %164 = vsyncpa [#allocation3], 1
    %165 = vsyncpa [#allocation4], 1

</llo_original>
